<compile_context>
chip_gen: v7x
topology: tpu7x:2x2x1
jax: 0.10.0
libtpu: 0.0.40
codegen_flags: <defaults>
</compile_context>

<pallas_src>
import jax
import jax.numpy as jnp
from jax.experimental import pallas as pl
from jax.experimental.pallas import tpu as pltpu

# ---- model dimensions (consistent with a (n, c, w, h) image input) ----
N_PER_VIEW = 2     # samples per view
N_VIEWS = 2        # SimCLR uses 2 augmented views
C_IN = 4           # input channels
H = W = 16         # spatial size
KH = KW = 3        # conv kernel
F_CONV = 32        # encoder feature channels
HID = 32           # projection-head hidden width
PROJ = 16          # projection dim

K_IM2COL = KH * KW * C_IN          # 36 (kept as-is; full-extent last dim)
F_PAD = 128                        # conv feature channels padded (lane-dense)
H_PAD = 128                        # hidden width padded
P_PAD = 128                        # projection dim padded


# --------------------------- fused Pallas kernel ------------------------------
def simclr_kernel(p_ref, wc_ref, bc_ref, w1_ref, b1_ref, w2_ref, b2_ref,
                  o_ref, feat_ref):
    """Fused encoder + decoder for ALL views in one invocation.

    p_ref:  (n*H*W, 36)    bf16  im2col patches (all views concatenated)
    wc_ref: (36, F_PAD)    bf16  conv weight (im2col layout, F zero-padded)
    bc_ref: (1, F_PAD)     f32   conv bias (zero-padded)
    w1_ref: (F_PAD, H_PAD) bf16  projection-head layer 1 weight
    b1_ref: (1, H_PAD)     f32
    w2_ref: (H_PAD, P_PAD) bf16  projection-head layer 2 weight
    b2_ref: (1, P_PAD)     f32
    o_ref:  (n, P_PAD)     f32   output slab (only first PROJ cols meaningful)
    feat_ref: (n, F_PAD)   f32   VMEM scratch: pooled features per sample
    """
    n = o_ref.shape[0]                      # total samples (all views)
    hw = p_ref.shape[0] // n                # spatial positions per sample
    inv_hw = 1.0 / hw

    # hoist loop-invariant loads (no per-iteration re-broadcast / re-load)
    wc = wc_ref[...]                        # (36, F_PAD) bf16
    bias_c = bc_ref[...]                    # (1, F_PAD)  f32

    # strip-mine conv + bias + ReLU + pool per sample: live tile is
    # (hw, F_PAD) f32 = 128 KiB, never the full (n*hw, F_PAD) activation.
    @pl.loop(0, n)
    def _(i):
        start = pl.multiple_of(i * hw, hw)
        patch = p_ref[pl.ds(start, hw), :]                        # (hw, 36) bf16
        acc = jnp.dot(patch, wc, preferred_element_type=jnp.float32)
        acc = jnp.maximum(acc + bias_c, 0.0)                      # bias+ReLU f32
        # global average pool for this sample -> one row of the feature scratch
        feat_ref[pl.ds(i, 1), :] = jnp.sum(acc, axis=0, keepdims=True) * inv_hw

    # projection head: Linear -> ReLU -> Linear (bf16 MXU inputs, f32 accum)
    feat = feat_ref[...]                                          # (n, F_PAD) f32
    h = jnp.dot(feat.astype(jnp.bfloat16), w1_ref[...],
                preferred_element_type=jnp.float32)
    h = jnp.maximum(h + b1_ref[...], 0.0)
    out = jnp.dot(h.astype(jnp.bfloat16), w2_ref[...],
                  preferred_element_type=jnp.float32)
    o_ref[...] = out + b2_ref[...]                                # single write


# ------------------------------ wrappers --------------------------------------
def _im2col(x_nhwc):
    """(B, H, W, C_IN) -> (B*H*W, 36) im2col patches (no lane padding)."""
    b = x_nhwc.shape[0]
    xp = jnp.pad(x_nhwc, ((0, 0), (1, 1), (1, 1), (0, 0)))
    cols = [xp[:, kh:kh + H, kw:kw + W, :]
            for kh in range(KH) for kw in range(KW)]
    p = jnp.concatenate(cols, axis=-1)                 # (B, H, W, 36)
    return p.reshape(b * H * W, K_IM2COL)


def _prepare_params(params):
    """Pad weights to lane-dense shapes; cast matmul operands to bf16."""
    wc = params["w_conv"].reshape(K_IM2COL, F_CONV)
    wc = jnp.pad(wc, ((0, 0), (0, F_PAD - F_CONV)))               # K stays 36
    bc = jnp.pad(params["b_conv"], ((0, 0), (0, F_PAD - F_CONV)))
    w1 = jnp.pad(params["w1"], ((0, F_PAD - F_CONV), (0, H_PAD - HID)))
    b1 = jnp.pad(params["b1"], ((0, 0), (0, H_PAD - HID)))
    w2 = jnp.pad(params["w2"], ((0, H_PAD - HID), (0, P_PAD - PROJ)))
    b2 = jnp.pad(params["b2"], ((0, 0), (0, P_PAD - PROJ)))
    return (wc.astype(jnp.bfloat16), bc.astype(jnp.float32),
            w1.astype(jnp.bfloat16), b1.astype(jnp.float32),
            w2.astype(jnp.bfloat16), b2.astype(jnp.float32))


def simclr_forward(views, params):
    """views: tuple of NCHW tensors (n, c, h, w) -> tuple of (n, PROJ)."""
    batch_size = views[0].shape[0]
    n_views = len(views)
    n_total = n_views * batch_size

    x = jnp.concatenate(views, axis=0)                 # cat along batch (NCHW)
    x = jnp.transpose(x, (0, 2, 3, 1))                 # NCHW -> NHWC
    x = x.astype(jnp.bfloat16)                         # cast early: halve bytes
    patches = _im2col(x)                               # (n_total*H*W, 36) bf16

    wc, bc, w1, b1, w2, b2 = _prepare_params(params)

    vmem = pl.BlockSpec(memory_space=pltpu.MemorySpace.VMEM)
    out = pl.pallas_call(
        simclr_kernel,
        out_shape=jax.ShapeDtypeStruct((n_total, P_PAD), jnp.float32),
        in_specs=[vmem] * 7,                           # whole arrays in VMEM
        out_specs=vmem,
        scratch_shapes=[pltpu.VMEM((n_total, F_PAD), jnp.float32)],
    )(patches, wc, bc, w1, b1, w2, b2)

    out = out[:, :PROJ]                                # drop lane padding
    return tuple(out[v * batch_size:(v + 1) * batch_size]
                 for v in range(n_views))


# ------------------------- pure-JAX f32 reference -----------------------------
def reference_forward(views, params):
    batch_size = views[0].shape[0]
    x = jnp.concatenate(views, axis=0)
    x = jnp.transpose(x, (0, 2, 3, 1))
    xp = jnp.pad(x, ((0, 0), (1, 1), (1, 1), (0, 0)))
    acc = jnp.zeros((x.shape[0], H, W, F_CONV), jnp.float32)
    for kh in range(KH):
        for kw in range(KW):
            acc += jnp.einsum("bhwc,cf->bhwf",
                              xp[:, kh:kh + H, kw:kw + W, :],
                              params["w_conv"][kh * KW + kw])
    acc = jnp.maximum(acc + params["b_conv"][0], 0.0)
    feat = jnp.mean(acc.reshape(x.shape[0], H * W, F_CONV), axis=1)
    h = jnp.maximum(feat @ params["w1"] + params["b1"], 0.0)
    out = h @ params["w2"] + params["b2"]
    return tuple(out[i * batch_size:(i + 1) * batch_size]
                 for i in range(len(views)))


def init_params(key):
    k = jax.random.split(key, 5)
    return {
        "w_conv": jax.random.normal(k[0], (KH * KW, C_IN, F_CONV), jnp.float32)
                  * 0.1,
        "b_conv": jnp.zeros((1, F_CONV), jnp.float32),
        "w1": jax.random.normal(k[1], (F_CONV, HID), jnp.float32) * 0.1,
        "b1": jnp.zeros((1, HID), jnp.float32),
        "w2": jax.random.normal(k[2], (HID, PROJ), jnp.float32) * 0.1,
        "b2": jnp.zeros((1, PROJ), jnp.float32),
    }


if __name__ == "__main__":
    key = jax.random.PRNGKey(0)
    kp, kv0, kv1 = jax.random.split(key, 3)
    params = init_params(kp)

    # two views of the same batch, PyTorch-style NCHW: (n, c, h, w)
    view0 = jax.random.normal(kv0, (N_PER_VIEW, C_IN, H, W), jnp.float32)
    view1 = jax.random.normal(kv1, (N_PER_VIEW, C_IN, H, W), jnp.float32)

    outs = simclr_forward((view0, view1), params)
    outs = jax.block_until_ready(outs)

    assert len(outs) == N_VIEWS
    assert all(o.shape == (N_PER_VIEW, PROJ) for o in outs)

    # correctness vs. f32 reference (bf16 MXU inputs, f32 accumulation)
    refs = reference_forward((view0, view1), params)
    for o, r in zip(outs, refs):
        err = float(jnp.max(jnp.abs(o - r)))
        assert err < 2e-2, f"max abs err {err}"

    print("KERNEL_OK")
</pallas_src>

<mosaic_0001>
module attributes {stable_mosaic.version = 11 : i64} {
  func.func @simclr_kernel(%arg0: memref<1024x36xbf16, #tpu.memory_space<vmem>>, %arg1: memref<36x128xbf16, #tpu.memory_space<vmem>>, %arg2: memref<1x128xf32, #tpu.memory_space<vmem>>, %arg3: memref<128x128xbf16, #tpu.memory_space<vmem>>, %arg4: memref<1x128xf32, #tpu.memory_space<vmem>>, %arg5: memref<128x128xbf16, #tpu.memory_space<vmem>>, %arg6: memref<1x128xf32, #tpu.memory_space<vmem>>, %arg7: memref<4x128xf32, #tpu.memory_space<vmem>>, %arg8: memref<4x128xf32, #tpu.memory_space<vmem>>) attributes {dimension_semantics = [], scalar_prefetch = 0 : i64, scratch_operands = 1 : i64, tpu.core_type = #tpu.core_type<tc>} {
    %c0 = arith.constant 0 : index
    %c0_0 = arith.constant 0 : index
    %0 = vector.load %arg1[%c0, %c0_0] : memref<36x128xbf16, #tpu.memory_space<vmem>>, vector<36x128xbf16>
    %c0_1 = arith.constant 0 : index
    %c0_2 = arith.constant 0 : index
    %1 = vector.load %arg2[%c0_1, %c0_2] : memref<1x128xf32, #tpu.memory_space<vmem>>, vector<1x128xf32>
    %c0_i32 = arith.constant 0 : i32
    %c4_i32 = arith.constant 4 : i32
    %2 = arith.addi %c0_i32, %c4_i32 : i32
    %c1_i32 = arith.constant 1 : i32
    scf.for %arg9 = %c0_i32 to %2 step %c1_i32  : i32 {
      %c1_i32_18 = arith.constant 1 : i32
      %19 = arith.muli %arg9, %c1_i32_18 : i32
      %c0_i32_19 = arith.constant 0 : i32
      %20 = arith.addi %c0_i32_19, %19 : i32
      %c256_i32 = arith.constant 256 : i32
      %21 = arith.muli %20, %c256_i32 : i32
      %22 = tpu.assume_multiple %21, 256 : i32
      %23 = arith.index_cast %22 : i32 to index
      %c0_20 = arith.constant 0 : index
      %24 = vector.load %arg0[%23, %c0_20] : memref<1024x36xbf16, #tpu.memory_space<vmem>>, vector<256x36xbf16>
      %cst_21 = arith.constant dense<0.000000e+00> : vector<256x128xf32>
      %25 = tpu.matmul %24, %0, %cst_21 {dimension_numbers = #tpu.dot_dimension_numbers<[1], [0], [0], [1], [0, 0, 1, 1], [], []>} : vector<256x36xbf16>, vector<36x128xbf16>, vector<256x128xf32> -> vector<256x128xf32>
      %26 = vector.broadcast %1 : vector<1x128xf32> to vector<256x128xf32>
      %27 = arith.addf %25, %26 : vector<256x128xf32>
      %cst_22 = arith.constant 0.000000e+00 : f32
      %28 = vector.broadcast %cst_22 : f32 to vector<256x128xf32>
      %29 = arith.maximumf %27, %28 : vector<256x128xf32>
      %cst_23 = arith.constant dense<0.000000e+00> : vector<128xf32>
      %30 = vector.multi_reduction <add>, %29, %cst_23 [0] : vector<256x128xf32> to vector<128xf32>
      %31 = vector.shape_cast %30 : vector<128xf32> to vector<1x128xf32>
      %cst_24 = arith.constant 3.906250e-03 : f32
      %32 = vector.broadcast %cst_24 : f32 to vector<1x128xf32>
      %33 = arith.mulf %31, %32 : vector<1x128xf32>
      %34 = arith.index_cast %20 : i32 to index
      %c0_25 = arith.constant 0 : index
      %35 = vector.load %arg8[%34, %c0_25] : memref<4x128xf32, #tpu.memory_space<vmem>>, vector<1x128xf32>
      tpu.vector_store %arg8[%34, %c0_25], %33 {strides = array<i32>} : memref<4x128xf32, #tpu.memory_space<vmem>>, vector<1x128xf32>,
    }
    %c4_i32_3 = arith.constant 4 : i32
    %c0_4 = arith.constant 0 : index
    %c0_5 = arith.constant 0 : index
    %3 = vector.load %arg8[%c0_4, %c0_5] : memref<4x128xf32, #tpu.memory_space<vmem>>, vector<4x128xf32>
    %4 = arith.truncf %3 : vector<4x128xf32> to vector<4x128xbf16>
    %c0_6 = arith.constant 0 : index
    %c0_7 = arith.constant 0 : index
    %5 = vector.load %arg3[%c0_6, %c0_7] : memref<128x128xbf16, #tpu.memory_space<vmem>>, vector<128x128xbf16>
    %cst = arith.constant dense<0.000000e+00> : vector<4x128xf32>
    %6 = tpu.matmul %4, %5, %cst {dimension_numbers = #tpu.dot_dimension_numbers<[1], [0], [0], [1], [0, 0, 1, 1], [], []>} : vector<4x128xbf16>, vector<128x128xbf16>, vector<4x128xf32> -> vector<4x128xf32>
    %c0_8 = arith.constant 0 : index
    %c0_9 = arith.constant 0 : index
    %7 = vector.load %arg4[%c0_8, %c0_9] : memref<1x128xf32, #tpu.memory_space<vmem>>, vector<1x128xf32>
    %8 = vector.broadcast %7 : vector<1x128xf32> to vector<4x128xf32>
    %9 = arith.addf %6, %8 : vector<4x128xf32>
    %cst_10 = arith.constant 0.000000e+00 : f32
    %10 = vector.broadcast %cst_10 : f32 to vector<4x128xf32>
    %11 = arith.maximumf %9, %10 : vector<4x128xf32>
    %12 = arith.truncf %11 : vector<4x128xf32> to vector<4x128xbf16>
    %c0_11 = arith.constant 0 : index
    %c0_12 = arith.constant 0 : index
    %13 = vector.load %arg5[%c0_11, %c0_12] : memref<128x128xbf16, #tpu.memory_space<vmem>>, vector<128x128xbf16>
    %cst_13 = arith.constant dense<0.000000e+00> : vector<4x128xf32>
    %14 = tpu.matmul %12, %13, %cst_13 {dimension_numbers = #tpu.dot_dimension_numbers<[1], [0], [0], [1], [0, 0, 1, 1], [], []>} : vector<4x128xbf16>, vector<128x128xbf16>, vector<4x128xf32> -> vector<4x128xf32>
    %c0_14 = arith.constant 0 : index
    %c0_15 = arith.constant 0 : index
    %15 = vector.load %arg6[%c0_14, %c0_15] : memref<1x128xf32, #tpu.memory_space<vmem>>, vector<1x128xf32>
    %16 = vector.broadcast %15 : vector<1x128xf32> to vector<4x128xf32>
    %17 = arith.addf %14, %16 : vector<4x128xf32>
    %c0_16 = arith.constant 0 : index
    %c0_17 = arith.constant 0 : index
    %18 = vector.load %arg7[%c0_16, %c0_17] : memref<4x128xf32, #tpu.memory_space<vmem>>, vector<4x128xf32>
    tpu.vector_store %arg7[%c0_16, %c0_17], %17 {strides = array<i32>} : memref<4x128xf32, #tpu.memory_space<vmem>>, vector<4x128xf32>,
    return
  }
}

</mosaic_0001>

<llo_original>
// kernel: tpu_custom_call.1
$region0: #{tpu_custom_call.1}
  #allocation0 [shape = 'u32[]', space=smem, size = 0x4, offset = 0x4, fixed_abs, tag = 'smem constant byte address 0x4 - core index']
  #allocation1 [shape = 'u32[144,128]{1,0:T(1,128)}', space=vmem, size = 0x12000, scoped, tag = 'internal scratch']
  #allocation2 [shape = 'f32[4,128]{1,0:T(4,128)}', space=vmem, size = 0x800, scoped, tag = 'scratch operand']
  %s0 = inlined_call_operand.vmem [shape: bf16[1024,36], index: 0, kind: input, shape index: {}]
  %s1 = inlined_call_operand.vmem [shape: bf16[36,128], index: 1, kind: input, shape index: {}]
  %s2 = inlined_call_operand.vmem [shape: f32[1,128], index: 2, kind: input, shape index: {}]
  %s3 = inlined_call_operand.vmem [shape: bf16[128,128], index: 3, kind: input, shape index: {}]
  %s4 = inlined_call_operand.vmem [shape: f32[1,128], index: 4, kind: input, shape index: {}]
  %s5 = inlined_call_operand.vmem [shape: bf16[128,128], index: 5, kind: input, shape index: {}]
  %s6 = inlined_call_operand.vmem [shape: f32[1,128], index: 6, kind: input, shape index: {}]
  %s7 = inlined_call_operand.hbm [shape: f32[4,128], index: 7, kind: output, shape index: {}]
  %s8 = sld [smem:[#allocation0]]
  $region45: #{tpu_custom_call.1} parent=0
    _
  %s10 = ssub.s32 1, %s8
  %s11 = scalar_select 0, %s10, %s8
  $region1: #{tpu_custom_call.1} parent=0
    #allocation3 [shape = 'u8[2048]{0}', space=vmem, size = 0x800, scoped, tag = 'output window, operand 0, single buffered']
    #allocation4 [shape = 's32[1]{0}', space=sflag, size = 0x4, scoped, tag = 'scoped memory for tpu_custom_call.1']
    %12 = vsyncpa [#allocation4], 0
    // Predicated region
    $region2: #{tpu_custom_call.1} parent=1 // pred_check
      _
    $region3: #{tpu_custom_call.1} parent=1 // pred_check_branch
      %14 = sbr.rel (0) target = $region5
    $region4: #{tpu_custom_call.1} parent=1 // pred_region
      _
    $region5: #{tpu_custom_call.1} parent=1 // pred_fallthru
      _
    // Predicated region
    $region6: #{tpu_custom_call.1} parent=1 // pred_check
      _
    $region7: #{tpu_custom_call.1} parent=1 // pred_check_branch
      %16 = sbr.rel (0) target = $region9
    $region8: #{tpu_custom_call.1} parent=1 // pred_region
      _
    $region9: #{tpu_custom_call.1} parent=1 // pred_fallthru
      _
    // Predicated region
    $region10: #{tpu_custom_call.1} parent=1 // pred_check
      _
    $region11: #{tpu_custom_call.1} parent=1 // pred_check_branch
      %18 = sbr.rel (0) target = $region13
    $region12: #{tpu_custom_call.1} parent=1 // pred_region
      _
    $region13: #{tpu_custom_call.1} parent=1 // pred_fallthru
      _
    // Predicated region
    $region14: #{tpu_custom_call.1} parent=1 // pred_check
      _
    $region15: #{tpu_custom_call.1} parent=1 // pred_check_branch
      %20 = sbr.rel (0) target = $region17
    $region16: #{tpu_custom_call.1} parent=1 // pred_region
      _
    $region17: #{tpu_custom_call.1} parent=1 // pred_fallthru
      _
    // Predicated region
    $region18: #{tpu_custom_call.1} parent=1 // pred_check
      _
    $region19: #{tpu_custom_call.1} parent=1 // pred_check_branch
      %22 = sbr.rel (0) target = $region21
    $region20: #{tpu_custom_call.1} parent=1 // pred_region
      _
    $region21: #{tpu_custom_call.1} parent=1 // pred_fallthru
      _
    // Predicated region
    $region22: #{tpu_custom_call.1} parent=1 // pred_check
      _
    $region23: #{tpu_custom_call.1} parent=1 // pred_check_branch
      %24 = sbr.rel (0) target = $region25
    $region24: #{tpu_custom_call.1} parent=1 // pred_region
      _
    $region25: #{tpu_custom_call.1} parent=1 // pred_fallthru
      _
    // Predicated region
    $region26: #{tpu_custom_call.1} parent=1 // pred_check
      _
    $region27: #{tpu_custom_call.1} parent=1 // pred_check_branch
      %26 = sbr.rel (0) target = $region29
    $region28: #{tpu_custom_call.1} parent=1 // pred_region
      _
    $region29: #{tpu_custom_call.1} parent=1 // pred_fallthru
      _
    %v28 = vld [vmem:[%s1] sm:$0xf]
    %v29 = vld [vmem:[%s1 + $0x4] sm:$0xf]
    %v30 = vld [vmem:[%s1 + $0x8] sm:$0xf]
    %v31 = vld [vmem:[%s1 + $0xc] sm:$0xf]
    %v32 = vld [vmem:[%s1 + $0x10] sm:$0x3]
    %v33 = vld [vmem:[%s2] sm:$0x1]
    loop: start=0, step=1, limit=4
    $region30: #{tpu_custom_call.1} parent=1 // loop_pre_header
      _
    $region31: #{tpu_custom_call.1} parent=1 // loop_header
      %s35 = sphi 0, %s39
      %p36 = scmp.ge.s32.totalorder %s35, 4
    $region32: #{tpu_custom_call.1} parent=1 // loop_header_branch
      %38 = sbr.rel (%p36) target = $region36
    $region33: #{tpu_custom_call.1} parent=1 // loop_body
      %s40 = smul.u32 %s35, 256
      %s41 = sshra.s32 %s40, 3
      %s42 = sand.u32 %s40, 7
      %s43 = smul.addr %s41, 4
      %s44 = scalar_lea.vmem %s0, %s43
      %v45 = vld [vmem:[%s44] sm:$0xf]
      %v46 = vld [vmem:[%s44 + $0x4] sm:$0xf]
      %v47 = vld [vmem:[%s44 + $0x8] sm:$0xf]
      %v48 = vld [vmem:[%s44 + $0xc] sm:$0xf]
      %v49 = vld [vmem:[%s44 + $0x10] sm:$0xf]
      %v50 = vld [vmem:[%s44 + $0x14] sm:$0xf]
      %v51 = vld [vmem:[%s44 + $0x18] sm:$0xf]
      %v52 = vld [vmem:[%s44 + $0x1c] sm:$0xf]
      %v53 = vld [vmem:[%s44 + $0x20] sm:$0xf]
      %v54 = vld [vmem:[%s44 + $0x24] sm:$0xf]
      %v55 = vld [vmem:[%s44 + $0x28] sm:$0xf]
      %v56 = vld [vmem:[%s44 + $0x2c] sm:$0xf]
      %v57 = vld [vmem:[%s44 + $0x30] sm:$0xf]
      %v58 = vld [vmem:[%s44 + $0x34] sm:$0xf]
      %v59 = vld [vmem:[%s44 + $0x38] sm:$0xf]
      %v60 = vld [vmem:[%s44 + $0x3c] sm:$0xf]
      %v61 = vld [vmem:[%s44 + $0x40] sm:$0xf]
      %v62 = vld [vmem:[%s44 + $0x44] sm:$0xf]
      %v63 = vld [vmem:[%s44 + $0x48] sm:$0xf]
      %v64 = vld [vmem:[%s44 + $0x4c] sm:$0xf]
      %v65 = vld [vmem:[%s44 + $0x50] sm:$0xf]
      %v66 = vld [vmem:[%s44 + $0x54] sm:$0xf]
      %v67 = vld [vmem:[%s44 + $0x58] sm:$0xf]
      %v68 = vld [vmem:[%s44 + $0x5c] sm:$0xf]
      %v69 = vld [vmem:[%s44 + $0x60] sm:$0xf]
      %v70 = vld [vmem:[%s44 + $0x64] sm:$0xf]
      %v71 = vld [vmem:[%s44 + $0x68] sm:$0xf]
      %v72 = vld [vmem:[%s44 + $0x6c] sm:$0xf]
      %v73 = vld [vmem:[%s44 + $0x70] sm:$0xf]
      %v74 = vld [vmem:[%s44 + $0x74] sm:$0xf]
      %v75 = vld [vmem:[%s44 + $0x78] sm:$0xf]
      %v76 = vld [vmem:[%s44 + $0x7c] sm:$0xf]
      %v78 = vlaneseq
      %v79 = vshrl.u32 %v78, 7
      %v80 = vsub.s32 0, %v79
      %v81 = vrot.slane %v33, %v80
      %v115 = vunpack.c.l.b16 %v45
      %v116 = vunpack.c.l.b16 %v46
      %v117 = vunpack.c.l.b16 %v47
      %v118 = vunpack.c.l.b16 %v48
      %v119 = vunpack.c.l.b16 %v49
      %v120 = vunpack.c.l.b16 %v50
      %v121 = vunpack.c.l.b16 %v51
      %v122 = vunpack.c.l.b16 %v52
      %v123 = vunpack.c.l.b16 %v53
      %v124 = vunpack.c.l.b16 %v54
      %v125 = vunpack.c.l.b16 %v55
      %v126 = vunpack.c.l.b16 %v56
      %v127 = vunpack.c.l.b16 %v57
      %v128 = vunpack.c.l.b16 %v58
      %v129 = vunpack.c.l.b16 %v59
      %v130 = vunpack.c.l.b16 %v60
      %v131 = vunpack.c.l.b16 %v61
      %v132 = vunpack.c.l.b16 %v62
      %v133 = vunpack.c.l.b16 %v63
      %v134 = vunpack.c.l.b16 %v64
      %v135 = vunpack.c.l.b16 %v65
      %v136 = vunpack.c.l.b16 %v66
      %v137 = vunpack.c.l.b16 %v67
      %v138 = vunpack.c.l.b16 %v68
      %v139 = vunpack.c.l.b16 %v69
      %v140 = vunpack.c.l.b16 %v70
      %v141 = vunpack.c.l.b16 %v71
      %v142 = vunpack.c.l.b16 %v72
      %v143 = vunpack.c.l.b16 %v73
      %v144 = vunpack.c.l.b16 %v74
      %v145 = vunpack.c.l.b16 %v75
      %v146 = vunpack.c.l.b16 %v76
      %v147 = vpack.c.b16 %v116, %v115
      %v148 = vpack.c.b16 %v118, %v117
      %v149 = vpack.c.b16 %v120, %v119
      %v150 = vpack.c.b16 %v122, %v121
      %v151 = vpack.c.b16 %v124, %v123
      %v152 = vpack.c.b16 %v126, %v125
      %v153 = vpack.c.b16 %v128, %v127
      %v154 = vpack.c.b16 %v130, %v129
      %v155 = vpack.c.b16 %v132, %v131
      %v156 = vpack.c.b16 %v134, %v133
      %v157 = vpack.c.b16 %v136, %v135
      %v158 = vpack.c.b16 %v138, %v137
      %v159 = vpack.c.b16 %v140, %v139
      %v160 = vpack.c.b16 %v142, %v141
      %v161 = vpack.c.b16 %v144, %v143
      %v162 = vpack.c.b16 %v146, %v145
      %v168 = vunpack.c.l.b16 %v28
      %v169 = vunpack.c.l.b16 %v29
      %v170 = vunpack.c.l.b16 %v30
      %v171 = vunpack.c.l.b16 %v31
      %v172 = vunpack.c.l.b16 %v32
      %v173 = vpack.c.b16 %v169, %v168
      %v174 = vpack.c.b16 %v171, %v170
      %v175 = vpack.c.b16 %v172, %v172
      %vm178 = vcmask 293888
      %v180 = vsel %vm178, %v147, 0
      %v183 = vsel %vm178, %v148, 0
      %v186 = vsel %vm178, %v149, 0
      %v189 = vsel %vm178, %v150, 0
      %v192 = vsel %vm178, %v151, 0
      %v195 = vsel %vm178, %v152, 0
      %v198 = vsel %vm178, %v153, 0
      %v201 = vsel %vm178, %v154, 0
      %v204 = vsel %vm178, %v155, 0
      %v207 = vsel %vm178, %v156, 0
      %v210 = vsel %vm178, %v157, 0
      %v213 = vsel %vm178, %v158, 0
      %v216 = vsel %vm178, %v159, 0
      %v219 = vsel %vm178, %v160, 0
      %v222 = vsel %vm178, %v161, 0
      %v225 = vsel %vm178, %v162, 0
      %vm227 = vcmask 1041408
      %v229 = vsel %vm227, %v175, 0
      %231 = vmatprep.subr.bf16.mxu0 0
      %232 = vmatpush1.bf16.msra.mxu0 %v173
      %233 = vmatprep.subr.bf16.mxu0 0
      %234 = vmatpush1.bf16.msra.mxu0 %v174
      %235 = vmatprep.subr.bf16.mxu0 0
      %236 = vmatpush1.bf16.msra.mxu0 %v229
      %237 = vmatprep.subr.bf16.mxu0 0
      %238 = vmatpush1.bf16.msra.mxu0 0
      %239 = vmatprep.subr.bf16.mxu0 0
      %240 = vmatpush1.bf16.msra.mxu0 0
      %241 = vmatprep.subr.bf16.mxu0 0
      %242 = vmatpush1.bf16.msra.mxu0 0
      %243 = vmatprep.subr.bf16.mxu0 0
      %244 = vmatpush1.bf16.msra.mxu0 0
      %245 = vmatprep.subr.bf16.mxu0 0
      %246 = vmatpush1.bf16.msra.mxu0 0
      %247 = vmatprep.subr.bf16.mxu0 0
      %248 = vmatpush1.bf16.msra.mxu0 0
      %249 = vmatprep.subr.bf16.mxu0 0
      %250 = vmatpush1.bf16.msra.mxu0 0
      %251 = vmatprep.subr.bf16.mxu0 0
      %252 = vmatpush1.bf16.msra.mxu0 0
      %253 = vmatprep.subr.bf16.mxu0 0
      %254 = vmatpush1.bf16.msra.mxu0 0
      %255 = vmatprep.subr.bf16.mxu0 0
      %256 = vmatpush1.bf16.msra.mxu0 0
      %257 = vmatprep.subr.bf16.mxu0 0
      %258 = vmatpush1.bf16.msra.mxu0 0
      %259 = vmatprep.subr.bf16.mxu0 0
      %260 = vmatpush1.bf16.msra.mxu0 0
      %261 = vmatprep.subr.bf16.mxu0 0
      %262 = vmatpush1.bf16.msra.mxu0 0
      %263 = vmatprep.mubr.bf16.mxu0 0
      %264 = vmatmul.mubr.bf16.gmra.mrb[0].mxu0 %v180
      %v265 = vpop.f32.mrb[0].mxu0
      %v266 = vadd.f32 %v81, %v265
      %v267 = vpop.f32.mrb[0].mxu0
      %v268 = vpop.f32.mrb[0].mxu0
      %v269 = vadd.f32 %v81, %v268
      %v270 = vpop.f32.mrb[0].mxu0
      %271 = vmatprep.mubr.bf16.mxu0 0
      %272 = vmatmul.mubr.bf16.gmra.mrb[0].mxu0 %v183
      %v273 = vpop.f32.mrb[0].mxu0
      %v274 = vadd.f32 %v81, %v273
      %v275 = vpop.f32.mrb[0].mxu0
      %v276 = vpop.f32.mrb[0].mxu0
      %v277 = vadd.f32 %v81, %v276
      %v278 = vpop.f32.mrb[0].mxu0
      %279 = vmatprep.mubr.bf16.mxu0 0
      %280 = vmatmul.mubr.bf16.gmra.mrb[0].mxu0 %v186
      %v281 = vpop.f32.mrb[0].mxu0
      %v282 = vadd.f32 %v81, %v281
      %v283 = vpop.f32.mrb[0].mxu0
      %v284 = vpop.f32.mrb[0].mxu0
      %v285 = vadd.f32 %v81, %v284
      %v286 = vpop.f32.mrb[0].mxu0
      %287 = vmatprep.mubr.bf16.mxu0 0
      %288 = vmatmul.mubr.bf16.gmra.mrb[0].mxu0 %v189
      %v289 = vpop.f32.mrb[0].mxu0
      %v290 = vadd.f32 %v81, %v289
      %v291 = vpop.f32.mrb[0].mxu0
      %v292 = vpop.f32.mrb[0].mxu0
      %v293 = vadd.f32 %v81, %v292
      %v294 = vpop.f32.mrb[0].mxu0
      %295 = vmatprep.mubr.bf16.mxu0 0
      %296 = vmatmul.mubr.bf16.gmra.mrb[0].mxu0 %v192
      %v297 = vpop.f32.mrb[0].mxu0
      %v298 = vadd.f32 %v81, %v297
      %v299 = vpop.f32.mrb[0].mxu0
      %v300 = vpop.f32.mrb[0].mxu0
      %v301 = vadd.f32 %v81, %v300
      %v302 = vpop.f32.mrb[0].mxu0
      %303 = vmatprep.mubr.bf16.mxu0 0
      %304 = vmatmul.mubr.bf16.gmra.mrb[0].mxu0 %v195
      %v305 = vpop.f32.mrb[0].mxu0
      %v306 = vadd.f32 %v81, %v305
      %v307 = vpop.f32.mrb[0].mxu0
      %v308 = vpop.f32.mrb[0].mxu0
      %v309 = vadd.f32 %v81, %v308
      %v310 = vpop.f32.mrb[0].mxu0
      %311 = vmatprep.mubr.bf16.mxu0 0
      %312 = vmatmul.mubr.bf16.gmra.mrb[0].mxu0 %v198
      %v313 = vpop.f32.mrb[0].mxu0
      %v314 = vadd.f32 %v81, %v313
      %v315 = vpop.f32.mrb[0].mxu0
      %v316 = vpop.f32.mrb[0].mxu0
      %v317 = vadd.f32 %v81, %v316
      %v318 = vpop.f32.mrb[0].mxu0
      %319 = vmatprep.mubr.bf16.mxu0 0
      %320 = vmatmul.mubr.bf16.gmra.mrb[0].mxu0 %v201
      %v321 = vpop.f32.mrb[0].mxu0
      %v322 = vadd.f32 %v81, %v321
      %v323 = vpop.f32.mrb[0].mxu0
      %v324 = vpop.f32.mrb[0].mxu0
      %v325 = vadd.f32 %v81, %v324
      %v326 = vpop.f32.mrb[0].mxu0
      %327 = vmatprep.mubr.bf16.mxu0 0
      %328 = vmatmul.mubr.bf16.gmra.mrb[0].mxu0 %v204
      %v329 = vpop.f32.mrb[0].mxu0
      %v330 = vadd.f32 %v81, %v329
      %v331 = vpop.f32.mrb[0].mxu0
      %v332 = vpop.f32.mrb[0].mxu0
      %v333 = vadd.f32 %v81, %v332
      %v334 = vpop.f32.mrb[0].mxu0
      %335 = vmatprep.mubr.bf16.mxu0 0
      %336 = vmatmul.mubr.bf16.gmra.mrb[0].mxu0 %v207
      %v337 = vpop.f32.mrb[0].mxu0
      %v338 = vadd.f32 %v81, %v337
      %v339 = vpop.f32.mrb[0].mxu0
      %v340 = vpop.f32.mrb[0].mxu0
      %v341 = vadd.f32 %v81, %v340
      %v342 = vpop.f32.mrb[0].mxu0
      %343 = vmatprep.mubr.bf16.mxu0 0
      %344 = vmatmul.mubr.bf16.gmra.mrb[0].mxu0 %v210
      %v345 = vpop.f32.mrb[0].mxu0
      %v346 = vadd.f32 %v81, %v345
      %v347 = vpop.f32.mrb[0].mxu0
      %v348 = vpop.f32.mrb[0].mxu0
      %v349 = vadd.f32 %v81, %v348
      %v350 = vpop.f32.mrb[0].mxu0
      %351 = vmatprep.mubr.bf16.mxu0 0
      %352 = vmatmul.mubr.bf16.gmra.mrb[0].mxu0 %v213
      %v353 = vpop.f32.mrb[0].mxu0
      %v354 = vadd.f32 %v81, %v353
      %v355 = vpop.f32.mrb[0].mxu0
      %v356 = vpop.f32.mrb[0].mxu0
      %v357 = vadd.f32 %v81, %v356
      %v358 = vpop.f32.mrb[0].mxu0
      %359 = vmatprep.mubr.bf16.mxu0 0
      %360 = vmatmul.mubr.bf16.gmra.mrb[0].mxu0 %v216
      %v361 = vpop.f32.mrb[0].mxu0
      %v362 = vadd.f32 %v81, %v361
      %v363 = vpop.f32.mrb[0].mxu0
      %v364 = vpop.f32.mrb[0].mxu0
      %v365 = vadd.f32 %v81, %v364
      %v366 = vpop.f32.mrb[0].mxu0
      %367 = vmatprep.mubr.bf16.mxu0 0
      %368 = vmatmul.mubr.bf16.gmra.mrb[0].mxu0 %v219
      %v369 = vpop.f32.mrb[0].mxu0
      %v370 = vadd.f32 %v81, %v369
      %v371 = vpop.f32.mrb[0].mxu0
      %v372 = vpop.f32.mrb[0].mxu0
      %v373 = vadd.f32 %v81, %v372
      %v374 = vpop.f32.mrb[0].mxu0
      %375 = vmatprep.mubr.bf16.mxu0 0
      %376 = vmatmul.mubr.bf16.gmra.mrb[0].mxu0 %v222
      %v377 = vpop.f32.mrb[0].mxu0
      %v378 = vadd.f32 %v81, %v377
      %v379 = vpop.f32.mrb[0].mxu0
      %v380 = vpop.f32.mrb[0].mxu0
      %v381 = vadd.f32 %v81, %v380
      %v382 = vpop.f32.mrb[0].mxu0
      %383 = vmatprep.mubr.bf16.mxu0 0
      %384 = vmatmul.mubr.bf16.gmra.mrb[0].mxu0 %v225
      %v385 = vpop.f32.mrb[0].mxu0
      %v386 = vadd.f32 %v81, %v385
      %v387 = vpop.f32.mrb[0].mxu0
      %v388 = vpop.f32.mrb[0].mxu0
      %v389 = vadd.f32 %v81, %v388
      %v390 = vpop.f32.mrb[0].mxu0
      %391 = vdwg.mxu0
      %v392 = vmax.f32 %v266, 0.0
      %v393 = vmax.f32 %v269, 0.0
      %v394 = vmax.f32 %v274, 0.0
      %v395 = vmax.f32 %v277, 0.0
      %v396 = vmax.f32 %v282, 0.0
      %v397 = vmax.f32 %v285, 0.0
      %v398 = vmax.f32 %v290, 0.0
      %v399 = vmax.f32 %v293, 0.0
      %v400 = vmax.f32 %v298, 0.0
      %v401 = vmax.f32 %v301, 0.0
      %v402 = vmax.f32 %v306, 0.0
      %v403 = vmax.f32 %v309, 0.0
      %v404 = vmax.f32 %v314, 0.0
      %v405 = vmax.f32 %v317, 0.0
      %v406 = vmax.f32 %v322, 0.0
      %v407 = vmax.f32 %v325, 0.0
      %v408 = vmax.f32 %v330, 0.0
      %v409 = vmax.f32 %v333, 0.0
      %v410 = vmax.f32 %v338, 0.0
      %v411 = vmax.f32 %v341, 0.0
      %v412 = vmax.f32 %v346, 0.0
      %v413 = vmax.f32 %v349, 0.0
      %v414 = vmax.f32 %v354, 0.0
      %v415 = vmax.f32 %v357, 0.0
      %v416 = vmax.f32 %v362, 0.0
      %v417 = vmax.f32 %v365, 0.0
      %v418 = vmax.f32 %v370, 0.0
      %v419 = vmax.f32 %v373, 0.0
      %v420 = vmax.f32 %v378, 0.0
      %v421 = vmax.f32 %v381, 0.0
      %v422 = vmax.f32 %v386, 0.0
      %v423 = vmax.f32 %v389, 0.0
      %v424 = vadd.f32 %v392, %v393
      %v425 = vadd.f32 %v424, %v394
      %v426 = vadd.f32 %v425, %v395
      %v427 = vadd.f32 %v426, %v396
      %v428 = vadd.f32 %v427, %v397
      %v429 = vadd.f32 %v428, %v398
      %v430 = vadd.f32 %v429, %v399
      %v431 = vadd.f32 %v430, %v400
      %v432 = vadd.f32 %v431, %v401
      %v433 = vadd.f32 %v432, %v402
      %v434 = vadd.f32 %v433, %v403
      %v435 = vadd.f32 %v434, %v404
      %v436 = vadd.f32 %v435, %v405
      %v437 = vadd.f32 %v436, %v406
      %v438 = vadd.f32 %v437, %v407
      %v439 = vadd.f32 %v438, %v408
      %v440 = vadd.f32 %v439, %v409
      %v441 = vadd.f32 %v440, %v410
      %v442 = vadd.f32 %v441, %v411
      %v443 = vadd.f32 %v442, %v412
      %v444 = vadd.f32 %v443, %v413
      %v445 = vadd.f32 %v444, %v414
      %v446 = vadd.f32 %v445, %v415
      %v447 = vadd.f32 %v446, %v416
      %v448 = vadd.f32 %v447, %v417
      %v449 = vadd.f32 %v448, %v418
      %v450 = vadd.f32 %v449, %v419
      %v451 = vadd.f32 %v450, %v420
      %v452 = vadd.f32 %v451, %v421
      %v453 = vadd.f32 %v452, %v422
      %v454 = vadd.f32 %v453, %v423
      %v455 = vrot.slane %v454, 4
      %v456 = vadd.f32 %v454, %v455
      %v457 = vrot.slane %v456, 2
      %v458 = vadd.f32 %v456, %v457
      %v459 = vrot.slane %v458, 1
      %v460 = vadd.f32 %v458, %v459
      %v461 = vmul.f32 %v460, 0.00390625
      %s462 = scalar_lea.vmem [#allocation2], %s35
      %463 = vst [vmem:[%s462] sm:$0x1] %v461
    $region34: #{tpu_custom_call.1} parent=1 // loop_footer
      %s39 = sadd.s32 1, %s35
    $region35: #{tpu_custom_call.1} parent=1 // loop_footer_branch
      %34 = sbr.rel target = $region31
    $region36: #{tpu_custom_call.1} parent=1 // loop_exit
      _
    %v464 = vld [vmem:[#allocation2] sm:$0xf]
    %v465 = vpack.c.bf16 %v464, %v464
    %v466 = vld [vmem:[%s3] sm:$0xf]
    %v467 = vld [vmem:[%s3 + $0x4] sm:$0xf]
    %v468 = vld [vmem:[%s3 + $0x8] sm:$0xf]
    %v469 = vld [vmem:[%s3 + $0xc] sm:$0xf]
    %v470 = vld [vmem:[%s3 + $0x10] sm:$0xf]
    %v471 = vld [vmem:[%s3 + $0x14] sm:$0xf]
    %v472 = vld [vmem:[%s3 + $0x18] sm:$0xf]
    %v473 = vld [vmem:[%s3 + $0x1c] sm:$0xf]
    %v474 = vld [vmem:[%s3 + $0x20] sm:$0xf]
    %v475 = vld [vmem:[%s3 + $0x24] sm:$0xf]
    %v476 = vld [vmem:[%s3 + $0x28] sm:$0xf]
    %v477 = vld [vmem:[%s3 + $0x2c] sm:$0xf]
    %v478 = vld [vmem:[%s3 + $0x30] sm:$0xf]
    %v479 = vld [vmem:[%s3 + $0x34] sm:$0xf]
    %v480 = vld [vmem:[%s3 + $0x38] sm:$0xf]
    %v481 = vld [vmem:[%s3 + $0x3c] sm:$0xf]
    %v482 = vld [vmem:[%s4] sm:$0x1]
    %v484 = vlaneseq
    %v485 = vshrl.u32 %v484, 7
    %v486 = vsub.s32 0, %v485
    %v487 = vrot.slane %v482, %v486
    %v505 = vunpack.c.l.b16 %v466
    %v506 = vunpack.c.l.b16 %v467
    %v507 = vunpack.c.l.b16 %v468
    %v508 = vunpack.c.l.b16 %v469
    %v509 = vunpack.c.l.b16 %v470
    %v510 = vunpack.c.l.b16 %v471
    %v511 = vunpack.c.l.b16 %v472
    %v512 = vunpack.c.l.b16 %v473
    %v513 = vunpack.c.l.b16 %v474
    %v514 = vunpack.c.l.b16 %v475
    %v515 = vunpack.c.l.b16 %v476
    %v516 = vunpack.c.l.b16 %v477
    %v517 = vunpack.c.l.b16 %v478
    %v518 = vunpack.c.l.b16 %v479
    %v519 = vunpack.c.l.b16 %v480
    %v520 = vunpack.c.l.b16 %v481
    %v521 = vpack.c.b16 %v506, %v505
    %v522 = vpack.c.b16 %v508, %v507
    %v523 = vpack.c.b16 %v510, %v509
    %v524 = vpack.c.b16 %v512, %v511
    %v525 = vpack.c.b16 %v514, %v513
    %v526 = vpack.c.b16 %v516, %v515
    %v527 = vpack.c.b16 %v518, %v517
    %v528 = vpack.c.b16 %v520, %v519
    %537 = vmatprep.subr.bf16.mxu0 0
    %538 = vmatpush1.bf16.msra.mxu0 %v521
    %539 = vmatprep.subr.bf16.mxu0 0
    %540 = vmatpush1.bf16.msra.mxu0 %v522
    %541 = vmatprep.subr.bf16.mxu0 0
    %542 = vmatpush1.bf16.msra.mxu0 %v523
    %543 = vmatprep.subr.bf16.mxu0 0
    %544 = vmatpush1.bf16.msra.mxu0 %v524
    %545 = vmatprep.subr.bf16.mxu0 0
    %546 = vmatpush1.bf16.msra.mxu0 %v525
    %547 = vmatprep.subr.bf16.mxu0 0
    %548 = vmatpush1.bf16.msra.mxu0 %v526
    %549 = vmatprep.subr.bf16.mxu0 0
    %550 = vmatpush1.bf16.msra.mxu0 %v527
    %551 = vmatprep.subr.bf16.mxu0 0
    %552 = vmatpush1.bf16.msra.mxu0 %v528
    %553 = vmatprep.subr.bf16.mxu0 0
    %554 = vmatpush1.bf16.msra.mxu0 0
    %555 = vmatprep.subr.bf16.mxu0 0
    %556 = vmatpush1.bf16.msra.mxu0 0
    %557 = vmatprep.subr.bf16.mxu0 0
    %558 = vmatpush1.bf16.msra.mxu0 0
    %559 = vmatprep.subr.bf16.mxu0 0
    %560 = vmatpush1.bf16.msra.mxu0 0
    %561 = vmatprep.subr.bf16.mxu0 0
    %562 = vmatpush1.bf16.msra.mxu0 0
    %563 = vmatprep.subr.bf16.mxu0 0
    %564 = vmatpush1.bf16.msra.mxu0 0
    %565 = vmatprep.subr.bf16.mxu0 0
    %566 = vmatpush1.bf16.msra.mxu0 0
    %567 = vmatprep.subr.bf16.mxu0 0
    %568 = vmatpush1.bf16.msra.mxu0 0
    %569 = vmatprep.mubr.bf16.mxu0 0
    %570 = vmatmul.mubr.bf16.gmra.mrb[0].mxu0 %v465
    %v571 = vpop.f32.mrb[0].mxu0
    %v572 = vadd.f32 %v487, %v571
    %v573 = vpop.f32.mrb[0].mxu0
    %v574 = vpop.f32.mrb[0].mxu0
    %v575 = vpop.f32.mrb[0].mxu0
    %576 = vdwg.mxu0
    %v577 = vmax.f32 %v572, 0.0
    %v578 = vpack.c.bf16 %v577, %v577
    %v579 = vld [vmem:[%s5] sm:$0xf]
    %v580 = vld [vmem:[%s5 + $0x4] sm:$0xf]
    %v581 = vld [vmem:[%s5 + $0x8] sm:$0xf]
    %v582 = vld [vmem:[%s5 + $0xc] sm:$0xf]
    %v583 = vld [vmem:[%s5 + $0x10] sm:$0xf]
    %v584 = vld [vmem:[%s5 + $0x14] sm:$0xf]
    %v585 = vld [vmem:[%s5 + $0x18] sm:$0xf]
    %v586 = vld [vmem:[%s5 + $0x1c] sm:$0xf]
    %v587 = vld [vmem:[%s5 + $0x20] sm:$0xf]
    %v588 = vld [vmem:[%s5 + $0x24] sm:$0xf]
    %v589 = vld [vmem:[%s5 + $0x28] sm:$0xf]
    %v590 = vld [vmem:[%s5 + $0x2c] sm:$0xf]
    %v591 = vld [vmem:[%s5 + $0x30] sm:$0xf]
    %v592 = vld [vmem:[%s5 + $0x34] sm:$0xf]
    %v593 = vld [vmem:[%s5 + $0x38] sm:$0xf]
    %v594 = vld [vmem:[%s5 + $0x3c] sm:$0xf]
    %v595 = vld [vmem:[%s6] sm:$0x1]
    %v597 = vlaneseq
    %v598 = vshrl.u32 %v597, 7
    %v599 = vsub.s32 0, %v598
    %v600 = vrot.slane %v595, %v599
    %v618 = vunpack.c.l.b16 %v579
    %v619 = vunpack.c.l.b16 %v580
    %v620 = vunpack.c.l.b16 %v581
    %v621 = vunpack.c.l.b16 %v582
    %v622 = vunpack.c.l.b16 %v583
    %v623 = vunpack.c.l.b16 %v584
    %v624 = vunpack.c.l.b16 %v585
    %v625 = vunpack.c.l.b16 %v586
    %v626 = vunpack.c.l.b16 %v587
    %v627 = vunpack.c.l.b16 %v588
    %v628 = vunpack.c.l.b16 %v589
    %v629 = vunpack.c.l.b16 %v590
    %v630 = vunpack.c.l.b16 %v591
    %v631 = vunpack.c.l.b16 %v592
    %v632 = vunpack.c.l.b16 %v593
    %v633 = vunpack.c.l.b16 %v594
    %v634 = vpack.c.b16 %v619, %v618
    %v635 = vpack.c.b16 %v621, %v620
    %v636 = vpack.c.b16 %v623, %v622
    %v637 = vpack.c.b16 %v625, %v624
    %v638 = vpack.c.b16 %v627, %v626
    %v639 = vpack.c.b16 %v629, %v628
    %v640 = vpack.c.b16 %v631, %v630
    %v641 = vpack.c.b16 %v633, %v632
    %650 = vmatprep.subr.bf16.mxu0 0
    %651 = vmatpush1.bf16.msra.mxu0 %v634
    %652 = vmatprep.subr.bf16.mxu0 0
    %653 = vmatpush1.bf16.msra.mxu0 %v635
    %654 = vmatprep.subr.bf16.mxu0 0
    %655 = vmatpush1.bf16.msra.mxu0 %v636
    %656 = vmatprep.subr.bf16.mxu0 0
    %657 = vmatpush1.bf16.msra.mxu0 %v637
    %658 = vmatprep.subr.bf16.mxu0 0
    %659 = vmatpush1.bf16.msra.mxu0 %v638
    %660 = vmatprep.subr.bf16.mxu0 0
    %661 = vmatpush1.bf16.msra.mxu0 %v639
    %662 = vmatprep.subr.bf16.mxu0 0
    %663 = vmatpush1.bf16.msra.mxu0 %v640
    %664 = vmatprep.subr.bf16.mxu0 0
    %665 = vmatpush1.bf16.msra.mxu0 %v641
    %666 = vmatprep.subr.bf16.mxu0 0
    %667 = vmatpush1.bf16.msra.mxu0 0
    %668 = vmatprep.subr.bf16.mxu0 0
    %669 = vmatpush1.bf16.msra.mxu0 0
    %670 = vmatprep.subr.bf16.mxu0 0
    %671 = vmatpush1.bf16.msra.mxu0 0
    %672 = vmatprep.subr.bf16.mxu0 0
    %673 = vmatpush1.bf16.msra.mxu0 0
    %674 = vmatprep.subr.bf16.mxu0 0
    %675 = vmatpush1.bf16.msra.mxu0 0
    %676 = vmatprep.subr.bf16.mxu0 0
    %677 = vmatpush1.bf16.msra.mxu0 0
    %678 = vmatprep.subr.bf16.mxu0 0
    %679 = vmatpush1.bf16.msra.mxu0 0
    %680 = vmatprep.subr.bf16.mxu0 0
    %681 = vmatpush1.bf16.msra.mxu0 0
    %682 = vmatprep.mubr.bf16.mxu0 0
    %683 = vmatmul.mubr.bf16.gmra.mrb[0].mxu0 %v578
    %v684 = vpop.f32.mrb[0].mxu0
    %v685 = vadd.f32 %v600, %v684
    %v686 = vpop.f32.mrb[0].mxu0
    %v687 = vpop.f32.mrb[0].mxu0
    %v688 = vpop.f32.mrb[0].mxu0
    %689 = vdwg.mxu0
    %690 = vst [vmem:[#allocation3] sm:$0xf] %v685
    // Predicated region
    $region37: #{tpu_custom_call.1} parent=1 // pred_check
      _
    $region38: #{tpu_custom_call.1} parent=1 // pred_check_branch
      %692 = sbr.rel (0) target = $region40
    $region39: #{tpu_custom_call.1} parent=1 // pred_region
      %s694 = ssub.s32 64, 64
      %695 = vsyncadd [#allocation4], %s694
      %s697 = sshll.u32 [#allocation3], 4
      %s698 = int_to_ptr.vmem [resolvable:$true] %s697
      %700 = dma.vmem_to_hbm [thread:$0]  %s698, 64, %s7, [#allocation4]
    $region40: #{tpu_custom_call.1} parent=1 // pred_fallthru
      _
    // Predicated region
    $region41: #{tpu_custom_call.1} parent=1 // pred_check
      _
    $region42: #{tpu_custom_call.1} parent=1 // pred_check_branch
      %702 = sbr.rel (0) target = $region44
    $region43: #{tpu_custom_call.1} parent=1 // pred_region
      %703 = dma.done [#allocation4], 64
    $region44: #{tpu_custom_call.1} parent=1 // pred_fallthru
      _
    %704 = vsyncpa [#allocation4], 1

</llo_original>
